<compile_context>
chip_gen: v7x
topology: tpu7x:2x2x1
jax: 0.10.0
libtpu: 0.0.40
codegen_flags: <defaults>
</compile_context>

<pallas_src>
import jax
import jax.numpy as jnp
from jax.experimental import pallas as pl
from jax.experimental.pallas import tpu as pltpu

# ---- model hyperparameters (the `params` dict of the PyTorch module) ----
PARAMS = {"state_dim": 16, "embed_dim": 32}
HIDDEN = 256

DEFAULT_BATCH_TILE = 2048      # rows per grid step (review: good default)
MAX_BATCH_TILE = 4096          # cap so footprint stays inside v7x VMEM
MIN_GRID_STEPS = 2             # >=2 steps so both v7x TensorCores get tiles
VMEM_LIMIT_BYTES = 48 << 20    # explicit scoped-VMEM limit with headroom


def _round_up(n, m):
    return ((n + m - 1) // m) * m


def autoencoder_kernel(x_ref,
                       w1_ref, b1_ref,
                       w23_ref, b23_ref,
                       w4_ref, b4_ref,
                       out_ref):
    # bf16 MXU operands, f32 accumulation; elementwise math stays f32.
    x = x_ref[...].astype(jnp.bfloat16)

    h1 = jnp.dot(x, w1_ref[...], preferred_element_type=jnp.float32) + b1_ref[...]
    h1 = jnp.tanh(h1)

    # Fused encode2.decode1: single 256x256 matmul.
    h2 = jnp.dot(h1.astype(jnp.bfloat16), w23_ref[...],
                 preferred_element_type=jnp.float32) + b23_ref[...]
    h2 = jnp.tanh(h2)

    y = jnp.dot(h2.astype(jnp.bfloat16), w4_ref[...],
                preferred_element_type=jnp.float32) + b4_ref[...]

    out_ref[...] = jax.nn.sigmoid(y).astype(out_ref.dtype)


def _pack_kernel_params(params):
    """Fuse encode2/decode1 and cast MXU operands to bf16 (once, from f32)."""
    w1, b1, w2, b2, w3, b3, w4, b4 = params
    f32 = jnp.float32
    w23 = (w2.astype(f32) @ w3.astype(f32)).astype(jnp.bfloat16)
    b23 = b2.astype(f32) @ w3.astype(f32) + b3.astype(f32)
    return (w1.astype(jnp.bfloat16), b1.astype(f32),
            w23, b23,
            w4.astype(jnp.bfloat16), b4.astype(f32))


def state_autoencoder_forward(x, params, *, batch_tile=DEFAULT_BATCH_TILE):
    """x: (batch, state_dim) float32 -> (batch, state_dim) float32."""
    batch, state_dim = x.shape
    hidden = params[0].shape[1]

    w1b, b1f, w23, b23, w4b, b4f = _pack_kernel_params(params)

    # ---- tile / grid selection (step count first, then tile size) ----
    batch_tile = max(8, min(int(batch_tile), MAX_BATCH_TILE))
    batch8 = _round_up(batch, 8)
    num_steps = max(MIN_GRID_STEPS, pl.cdiv(batch8, batch_tile))
    tb = _round_up(pl.cdiv(batch8, num_steps), 8)
    padded = num_steps * tb
    if padded != batch:
        x = jnp.pad(x, ((0, padded - batch), (0, 0)))
    grid = (num_steps,)

    # Weights/biases: full-array blocks with constant index map -> VMEM resident.
    def resident(a):
        return pl.BlockSpec(a.shape, lambda i: (0,) * a.ndim)

    flops = 2 * padded * (state_dim * hidden + hidden * hidden + hidden * state_dim)
    transcendentals = padded * (2 * hidden + state_dim)   # 2x tanh + sigmoid
    weight_bytes = sum(int(p.size) * p.dtype.itemsize
                       for p in (w1b, b1f, w23, b23, w4b, b4f))
    bytes_accessed = (x.size * x.dtype.itemsize
                      + weight_bytes
                      + padded * state_dim * x.dtype.itemsize)

    out = pl.pallas_call(
        autoencoder_kernel,
        out_shape=jax.ShapeDtypeStruct((padded, state_dim), x.dtype),
        grid_spec=pltpu.PrefetchScalarGridSpec(
            num_scalar_prefetch=0,
            grid=grid,
            in_specs=[
                pl.BlockSpec((tb, state_dim), lambda i: (i, 0)),
                resident(w1b), resident(b1f),
                resident(w23), resident(b23),
                resident(w4b), resident(b4f),
            ],
            out_specs=pl.BlockSpec((tb, state_dim), lambda i: (i, 0)),
        ),
        compiler_params=pltpu.CompilerParams(
            dimension_semantics=("parallel",),        # megacore sharding on v7x
            vmem_limit_bytes=VMEM_LIMIT_BYTES,
        ),
        cost_estimate=pl.CostEstimate(
            flops=int(flops),
            transcendentals=int(transcendentals),
            bytes_accessed=int(bytes_accessed),
        ),
    )(x, w1b, b1f, w23, b23, w4b, b4f)

    return out[:batch]


def init_params(key, state_dim, embed_dim, hidden):
    """Deterministic synthetic weights, stored f32 as (in_features, out_features)."""
    ks = jax.random.split(key, 8)

    def lin(kw, kb, fan_in, fan_out):
        # PyTorch default init: U(-1/sqrt(fan_in), 1/sqrt(fan_in))
        bound = 1.0 / jnp.sqrt(jnp.float32(fan_in))
        w = jax.random.uniform(kw, (fan_in, fan_out), jnp.float32, -bound, bound)
        b = jax.random.uniform(kb, (1, fan_out), jnp.float32, -bound, bound)
        return w, b

    w1, b1 = lin(ks[0], ks[1], state_dim, hidden)     # encode1
    w2, b2 = lin(ks[2], ks[3], hidden, embed_dim)     # encode2
    w3, b3 = lin(ks[4], ks[5], embed_dim, hidden)     # decode1
    w4, b4 = lin(ks[6], ks[7], hidden, state_dim)     # decode2
    return (w1, b1, w2, b2, w3, b3, w4, b4)


def reference_forward_f32(x, params):
    """Straight f32 forward matching the PyTorch module (unfused)."""
    w1, b1, w2, b2, w3, b3, w4, b4 = [p.astype(jnp.float32) for p in params]
    h1 = jnp.tanh(x @ w1 + b1)
    z = h1 @ w2 + b2
    h2 = jnp.tanh(z @ w3 + b3)
    return jax.nn.sigmoid(h2 @ w4 + b4)


def reference_forward_fused_mixed(x, params):
    """Mirrors the kernel math exactly (fused W23, bf16 MXU operands, f32 accum)."""
    w1b, b1f, w23, b23, w4b, b4f = _pack_kernel_params(params)
    f32 = jnp.float32
    h1 = jnp.tanh(jnp.dot(x.astype(jnp.bfloat16), w1b,
                          preferred_element_type=f32) + b1f)
    h2 = jnp.tanh(jnp.dot(h1.astype(jnp.bfloat16), w23,
                          preferred_element_type=f32) + b23)
    y = jnp.dot(h2.astype(jnp.bfloat16), w4b, preferred_element_type=f32) + b4f
    return jax.nn.sigmoid(y)


if __name__ == "__main__":
    key = jax.random.PRNGKey(0)
    k_x, k_x2, k_p = jax.random.split(key, 3)

    state_dim = PARAMS["state_dim"]
    embed_dim = PARAMS["embed_dim"]
    params = init_params(k_p, state_dim, embed_dim, HIDDEN)

    # Small smoke test (minimum-size tiles, 2-step grid).
    batch = 8
    x = jax.random.normal(k_x, (batch, state_dim), jnp.float32)
    out = jax.block_until_ready(state_autoencoder_forward(x, params))
    assert out.shape == (batch, state_dim), out.shape
    assert bool(jnp.all(jnp.isfinite(out)))
    assert jnp.allclose(out, reference_forward_fused_mixed(x, params),
                        atol=1e-2, rtol=1e-2), "mismatch vs fused mixed-precision ref"
    assert jnp.allclose(out, reference_forward_f32(x, params),
                        atol=5e-2, rtol=5e-2), "mismatch vs f32 ref"

    # Exercise the multi-step grid + tail padding path (batch not a tile multiple).
    batch2 = 200
    x2 = jax.random.normal(k_x2, (batch2, state_dim), jnp.float32)
    out2 = jax.block_until_ready(
        state_autoencoder_forward(x2, params, batch_tile=64))
    assert out2.shape == (batch2, state_dim), out2.shape
    assert jnp.allclose(out2, reference_forward_fused_mixed(x2, params),
                        atol=1e-2, rtol=1e-2), "mismatch vs ref (gridded path)"
    assert jnp.allclose(out2, reference_forward_f32(x2, params),
                        atol=5e-2, rtol=5e-2), "mismatch vs f32 ref (gridded path)"

    print("KERNEL_OK")
</pallas_src>

<mosaic_0001>
module attributes {stable_mosaic.version = 11 : i64} {
  func.func @autoencoder_kernel(%arg0: i32, %arg1: memref<8x16xf32, #tpu.memory_space<vmem>>, %arg2: memref<16x256xbf16, #tpu.memory_space<vmem>>, %arg3: memref<1x256xf32, #tpu.memory_space<vmem>>, %arg4: memref<256x256xbf16, #tpu.memory_space<vmem>>, %arg5: memref<1x256xf32, #tpu.memory_space<vmem>>, %arg6: memref<256x16xbf16, #tpu.memory_space<vmem>>, %arg7: memref<1x16xf32, #tpu.memory_space<vmem>>, %arg8: memref<8x16xf32, #tpu.memory_space<vmem>>) attributes {dimension_semantics = [#tpu.dimension_semantics<parallel>], iteration_bounds = array<i64: 2>, scalar_prefetch = 0 : i64, scratch_operands = 0 : i64, tpu.core_type = #tpu.core_type<tc>, window_params = [{transform_indices = @transform_0, window_bounds = array<i64: 8, 16>}, {pipeline_mode = #tpu.pipeline_mode<synchronous>, transform_indices = @transform_1, window_bounds = array<i64: 16, 256>}, {pipeline_mode = #tpu.pipeline_mode<synchronous>, transform_indices = @transform_2, window_bounds = array<i64: 1, 256>}, {pipeline_mode = #tpu.pipeline_mode<synchronous>, transform_indices = @transform_3, window_bounds = array<i64: 256, 256>}, {pipeline_mode = #tpu.pipeline_mode<synchronous>, transform_indices = @transform_4, window_bounds = array<i64: 1, 256>}, {pipeline_mode = #tpu.pipeline_mode<synchronous>, transform_indices = @transform_5, window_bounds = array<i64: 256, 16>}, {pipeline_mode = #tpu.pipeline_mode<synchronous>, transform_indices = @transform_6, window_bounds = array<i64: 1, 16>}, {transform_indices = @transform_7, window_bounds = array<i64: 8, 16>}]} {
    %c0 = arith.constant 0 : index
    %c0_0 = arith.constant 0 : index
    %0 = vector.load %arg1[%c0, %c0_0] : memref<8x16xf32, #tpu.memory_space<vmem>>, vector<8x16xf32>
    %1 = arith.truncf %0 : vector<8x16xf32> to vector<8x16xbf16>
    %c0_1 = arith.constant 0 : index
    %c0_2 = arith.constant 0 : index
    %2 = vector.load %arg2[%c0_1, %c0_2] : memref<16x256xbf16, #tpu.memory_space<vmem>>, vector<16x256xbf16>
    %cst = arith.constant dense<0.000000e+00> : vector<8x256xf32>
    %3 = tpu.matmul %1, %2, %cst {dimension_numbers = #tpu.dot_dimension_numbers<[1], [0], [0], [1], [0, 0, 1, 1], [], []>} : vector<8x16xbf16>, vector<16x256xbf16>, vector<8x256xf32> -> vector<8x256xf32>
    %c0_3 = arith.constant 0 : index
    %c0_4 = arith.constant 0 : index
    %4 = vector.load %arg3[%c0_3, %c0_4] : memref<1x256xf32, #tpu.memory_space<vmem>>, vector<1x256xf32>
    %5 = vector.broadcast %4 : vector<1x256xf32> to vector<8x256xf32>
    %6 = arith.addf %3, %5 : vector<8x256xf32>
    %7 = math.tanh %6 : vector<8x256xf32>
    %8 = arith.truncf %7 : vector<8x256xf32> to vector<8x256xbf16>
    %c0_5 = arith.constant 0 : index
    %c0_6 = arith.constant 0 : index
    %9 = vector.load %arg4[%c0_5, %c0_6] : memref<256x256xbf16, #tpu.memory_space<vmem>>, vector<256x256xbf16>
    %cst_7 = arith.constant dense<0.000000e+00> : vector<8x256xf32>
    %10 = tpu.matmul %8, %9, %cst_7 {dimension_numbers = #tpu.dot_dimension_numbers<[1], [0], [0], [1], [0, 0, 1, 1], [], []>} : vector<8x256xbf16>, vector<256x256xbf16>, vector<8x256xf32> -> vector<8x256xf32>
    %c0_8 = arith.constant 0 : index
    %c0_9 = arith.constant 0 : index
    %11 = vector.load %arg5[%c0_8, %c0_9] : memref<1x256xf32, #tpu.memory_space<vmem>>, vector<1x256xf32>
    %12 = vector.broadcast %11 : vector<1x256xf32> to vector<8x256xf32>
    %13 = arith.addf %10, %12 : vector<8x256xf32>
    %14 = math.tanh %13 : vector<8x256xf32>
    %15 = arith.truncf %14 : vector<8x256xf32> to vector<8x256xbf16>
    %c0_10 = arith.constant 0 : index
    %c0_11 = arith.constant 0 : index
    %16 = vector.load %arg6[%c0_10, %c0_11] : memref<256x16xbf16, #tpu.memory_space<vmem>>, vector<256x16xbf16>
    %cst_12 = arith.constant dense<0.000000e+00> : vector<8x16xf32>
    %17 = tpu.matmul %15, %16, %cst_12 {dimension_numbers = #tpu.dot_dimension_numbers<[1], [0], [0], [1], [0, 0, 1, 1], [], []>} : vector<8x256xbf16>, vector<256x16xbf16>, vector<8x16xf32> -> vector<8x16xf32>
    %c0_13 = arith.constant 0 : index
    %c0_14 = arith.constant 0 : index
    %18 = vector.load %arg7[%c0_13, %c0_14] : memref<1x16xf32, #tpu.memory_space<vmem>>, vector<1x16xf32>
    %19 = vector.broadcast %18 : vector<1x16xf32> to vector<8x16xf32>
    %20 = arith.addf %17, %19 : vector<8x16xf32>
    %21 = arith.negf %20 : vector<8x16xf32>
    %22 = math.exp %21 : vector<8x16xf32>
    %cst_15 = arith.constant 1.000000e+00 : f32
    %23 = vector.broadcast %cst_15 : f32 to vector<8x16xf32>
    %24 = arith.addf %23, %22 : vector<8x16xf32>
    %25 = arith.divf %23, %24 : vector<8x16xf32>
    %c0_16 = arith.constant 0 : index
    %c0_17 = arith.constant 0 : index
    %26 = vector.load %arg8[%c0_16, %c0_17] : memref<8x16xf32, #tpu.memory_space<vmem>>, vector<8x16xf32>
    tpu.vector_store %arg8[%c0_16, %c0_17], %25 {strides = array<i32>} : memref<8x16xf32, #tpu.memory_space<vmem>>, vector<8x16xf32>,
    return
  }
  func.func @transform_0(%arg0: i32) -> (i32, i32) {
    %c0_i32 = arith.constant 0 : i32
    %c0_i32_0 = arith.constant 0 : i32
    return %arg0, %c0_i32 : i32, i32
  }
  func.func @transform_1(%arg0: i32) -> (i32, i32) {
    %c0_i32 = arith.constant 0 : i32
    %c0_i32_0 = arith.constant 0 : i32
    %c0_i32_1 = arith.constant 0 : i32
    return %c0_i32, %c0_i32_0 : i32, i32
  }
  func.func @transform_2(%arg0: i32) -> (i32, i32) {
    %c0_i32 = arith.constant 0 : i32
    %c0_i32_0 = arith.constant 0 : i32
    %c0_i32_1 = arith.constant 0 : i32
    return %c0_i32, %c0_i32_0 : i32, i32
  }
  func.func @transform_3(%arg0: i32) -> (i32, i32) {
    %c0_i32 = arith.constant 0 : i32
    %c0_i32_0 = arith.constant 0 : i32
    %c0_i32_1 = arith.constant 0 : i32
    return %c0_i32, %c0_i32_0 : i32, i32
  }
  func.func @transform_4(%arg0: i32) -> (i32, i32) {
    %c0_i32 = arith.constant 0 : i32
    %c0_i32_0 = arith.constant 0 : i32
    %c0_i32_1 = arith.constant 0 : i32
    return %c0_i32, %c0_i32_0 : i32, i32
  }
  func.func @transform_5(%arg0: i32) -> (i32, i32) {
    %c0_i32 = arith.constant 0 : i32
    %c0_i32_0 = arith.constant 0 : i32
    %c0_i32_1 = arith.constant 0 : i32
    return %c0_i32, %c0_i32_0 : i32, i32
  }
  func.func @transform_6(%arg0: i32) -> (i32, i32) {
    %c0_i32 = arith.constant 0 : i32
    %c0_i32_0 = arith.constant 0 : i32
    %c0_i32_1 = arith.constant 0 : i32
    return %c0_i32, %c0_i32_0 : i32, i32
  }
  func.func @transform_7(%arg0: i32) -> (i32, i32) {
    %c0_i32 = arith.constant 0 : i32
    %c0_i32_0 = arith.constant 0 : i32
    return %arg0, %c0_i32 : i32, i32
  }
}

</mosaic_0001>

<llo_original>
// kernel: tpu_custom_call.1
$region0: #{tpu_custom_call.1}
  #allocation0 [shape = 'u32[]', space=smem, size = 0x4, offset = 0x4, fixed_abs, tag = 'smem constant byte address 0x4 - core index']
  #allocation1 [shape = 'u32[144,128]{1,0:T(1,128)}', space=vmem, size = 0x12000, scoped, tag = 'internal scratch']
  %s0 = inlined_call_operand.vmem [shape: f32[16,16], index: 0, kind: input, shape index: {}]
  %s1 = inlined_call_operand.vmem [shape: bf16[16,256], index: 1, kind: input, shape index: {}]
  %s2 = inlined_call_operand.vmem [shape: f32[1,256], index: 2, kind: input, shape index: {}]
  %s3 = inlined_call_operand.hbm [shape: bf16[256,256], index: 3, kind: input, shape index: {}]
  %s4 = inlined_call_operand.vmem [shape: f32[1,256], index: 4, kind: input, shape index: {}]
  %s5 = inlined_call_operand.vmem [shape: bf16[256,16], index: 5, kind: input, shape index: {}]
  %s6 = inlined_call_operand.vmem [shape: f32[1,16], index: 6, kind: input, shape index: {}]
  %s7 = inlined_call_operand.hbm [shape: f32[16,16], index: 7, kind: output, shape index: {}]
  %s8 = sld [smem:[#allocation0]]
  $region65: #{tpu_custom_call.1} parent=0
    _
  %s10 = ssub.s32 1, %s8
  %s11 = scalar_select 0, %s10, %s8
  $region1: #{tpu_custom_call.1} parent=0
    #allocation2 [shape = 'u8[131072]{0}', space=vmem, size = 0x20000, scoped, tag = 'input window, operand 3, single buffered']
    #allocation3 [shape = 's32[2]{0}', space=sflag, size = 0x8, scoped, tag = 'scoped memory for tpu_custom_call.1']
    #allocation4 [shape = 's32[2]{0}', space=sflag, size = 0x8, scoped, tag = 'scoped memory for tpu_custom_call.1']
    #allocation5 [shape = 'u8[8192]{0}', space=vmem, size = 0x2000, scoped, tag = 'output window, operand 0']
    %12 = vsyncpa [#allocation3], 0
    %13 = vsyncpa [#allocation4], 0
    %s14 = scalar_lea.sflag [#allocation4], 1
    %15 = vsyncpa %s14, 0
    loop: start=0, step=1, limit=4
    $region2: #{tpu_custom_call.1} parent=1 // loop_pre_header
      _
    $region3: #{tpu_custom_call.1} parent=1 // loop_header
      %s17 = sphi 0, %s21
      %p18 = scmp.ge.s32.totalorder %s17, 4
      %s27 = sphi 0, %s29
      %s30 = sphi 0, %s27
      %s31 = sphi 0, %s30
      %s47 = sphi 0, %s31
      %s51 = sphi 0, %s51
      %s53 = sphi 0, %s51
      %s54 = sphi 0, %s53
      %s68 = sphi 0, %s54
      %s72 = sphi 0, %s72
      %s74 = sphi 0, %s72
      %s75 = sphi 0, %s74
      %s89 = sphi 0, %s75
      %s93 = sphi 0, %s93
      %s95 = sphi 0, %s93
      %s96 = sphi 0, %s95
      %s110 = sphi 0, %s96
      %s114 = sphi 0, %s114
      %s116 = sphi 0, %s114
      %s117 = sphi 0, %s116
      %s131 = sphi 0, %s117
      %s135 = sphi 0, %s135
      %s137 = sphi 0, %s135
      %s138 = sphi 0, %s137
      %s152 = sphi 0, %s138
      %s156 = sphi 0, %s156
      %s158 = sphi 0, %s156
      %s159 = sphi 0, %s158
      %s173 = sphi 0, %s159
      %s179 = sphi 0, %s181
      %s182 = sphi 0, %s179
      %s183 = sphi 0, %s182
      %s199 = sphi 0, %s183
    $region4: #{tpu_custom_call.1} parent=1 // loop_header_branch
      %20 = sbr.rel (%p18) target = $region8
    $region5: #{tpu_custom_call.1} parent=1 // loop_body
      %s22 = ssub.s32 %s17, 1
      %s23 = ssub.s32 %s17, 2
      %s24 = sadd.s32 %s17, 1
      %s25 = ssub.s32 %s17, %s24
      %p26 = scmp.eq.s32.totalorder %s25, 0
      %s28 = sadd.s32 %s27, 1
      %s29 = scalar_select %p26, %s27, %s28
      %p32 = pneg %p26
      %p33 = scmp.eq.s32.totalorder %s17, 1
      %p34 = por %p32, %p33
      %p35 = scmp.ne.s32.totalorder %s27, %s30
      %p36 = scmp.eq.s32.totalorder %s17, 0
      %p37 = por %p35, %p36
      %p38 = scmp.ne.s32.totalorder %s27, %s30
      %p39 = scmp.eq.s32.totalorder %s22, 1
      %p40 = por %p38, %p39
      %p41 = scmp.ne.s32.totalorder %s30, %s31
      %p42 = scmp.eq.s32.totalorder %s22, 0
      %p43 = por %p41, %p42
      %p44 = scmp.ne.s32.totalorder %s30, %s31
      %p45 = scmp.eq.s32.totalorder %s23, 1
      %p46 = por %p44, %p45
      %p48 = scmp.ne.s32.totalorder %s31, %s47
      %p49 = scmp.eq.s32.totalorder %s23, 0
      %p50 = por %p48, %p49
      %s52 = sadd.s32 %s51, 1
      %p55 = scmp.eq.s32.totalorder %s17, 1
      %p56 = scmp.ne.s32.totalorder %s51, %s53
      %p57 = scmp.eq.s32.totalorder %s17, 0
      %p58 = por %p56, %p57
      %p59 = scmp.ne.s32.totalorder %s51, %s53
      %p60 = scmp.eq.s32.totalorder %s22, 1
      %p61 = por %p59, %p60
      %p62 = scmp.ne.s32.totalorder %s53, %s54
      %p63 = scmp.eq.s32.totalorder %s22, 0
      %p64 = por %p62, %p63
      %p65 = scmp.ne.s32.totalorder %s53, %s54
      %p66 = scmp.eq.s32.totalorder %s23, 1
      %p67 = por %p65, %p66
      %p69 = scmp.ne.s32.totalorder %s54, %s68
      %p70 = scmp.eq.s32.totalorder %s23, 0
      %p71 = por %p69, %p70
      %s73 = sadd.s32 %s72, 1
      %p76 = scmp.eq.s32.totalorder %s17, 1
      %p77 = scmp.ne.s32.totalorder %s72, %s74
      %p78 = scmp.eq.s32.totalorder %s17, 0
      %p79 = por %p77, %p78
      %p80 = scmp.ne.s32.totalorder %s72, %s74
      %p81 = scmp.eq.s32.totalorder %s22, 1
      %p82 = por %p80, %p81
      %p83 = scmp.ne.s32.totalorder %s74, %s75
      %p84 = scmp.eq.s32.totalorder %s22, 0
      %p85 = por %p83, %p84
      %p86 = scmp.ne.s32.totalorder %s74, %s75
      %p87 = scmp.eq.s32.totalorder %s23, 1
      %p88 = por %p86, %p87
      %p90 = scmp.ne.s32.totalorder %s75, %s89
      %p91 = scmp.eq.s32.totalorder %s23, 0
      %p92 = por %p90, %p91
      %s94 = sadd.s32 %s93, 1
      %p97 = scmp.eq.s32.totalorder %s17, 1
      %p98 = scmp.ne.s32.totalorder %s93, %s95
      %p99 = scmp.eq.s32.totalorder %s17, 0
      %p100 = por %p98, %p99
      %p101 = scmp.ne.s32.totalorder %s93, %s95
      %p102 = scmp.eq.s32.totalorder %s22, 1
      %p103 = por %p101, %p102
      %p104 = scmp.ne.s32.totalorder %s95, %s96
      %p105 = scmp.eq.s32.totalorder %s22, 0
      %p106 = por %p104, %p105
      %p107 = scmp.ne.s32.totalorder %s95, %s96
      %p108 = scmp.eq.s32.totalorder %s23, 1
      %p109 = por %p107, %p108
      %p111 = scmp.ne.s32.totalorder %s96, %s110
      %p112 = scmp.eq.s32.totalorder %s23, 0
      %p113 = por %p111, %p112
      %s115 = sadd.s32 %s114, 1
      %p118 = scmp.eq.s32.totalorder %s17, 1
      %p119 = scmp.ne.s32.totalorder %s114, %s116
      %p120 = scmp.eq.s32.totalorder %s17, 0
      %p121 = por %p119, %p120
      %p122 = scmp.ne.s32.totalorder %s114, %s116
      %p123 = scmp.eq.s32.totalorder %s22, 1
      %p124 = por %p122, %p123
      %p125 = scmp.ne.s32.totalorder %s116, %s117
      %p126 = scmp.eq.s32.totalorder %s22, 0
      %p127 = por %p125, %p126
      %p128 = scmp.ne.s32.totalorder %s116, %s117
      %p129 = scmp.eq.s32.totalorder %s23, 1
      %p130 = por %p128, %p129
      %p132 = scmp.ne.s32.totalorder %s117, %s131
      %p133 = scmp.eq.s32.totalorder %s23, 0
      %p134 = por %p132, %p133
      %s136 = sadd.s32 %s135, 1
      %p139 = scmp.eq.s32.totalorder %s17, 1
      %p140 = scmp.ne.s32.totalorder %s135, %s137
      %p141 = scmp.eq.s32.totalorder %s17, 0
      %p142 = por %p140, %p141
      %p143 = scmp.ne.s32.totalorder %s135, %s137
      %p144 = scmp.eq.s32.totalorder %s22, 1
      %p145 = por %p143, %p144
      %p146 = scmp.ne.s32.totalorder %s137, %s138
      %p147 = scmp.eq.s32.totalorder %s22, 0
      %p148 = por %p146, %p147
      %p149 = scmp.ne.s32.totalorder %s137, %s138
      %p150 = scmp.eq.s32.totalorder %s23, 1
      %p151 = por %p149, %p150
      %p153 = scmp.ne.s32.totalorder %s138, %s152
      %p154 = scmp.eq.s32.totalorder %s23, 0
      %p155 = por %p153, %p154
      %s157 = sadd.s32 %s156, 1
      %p160 = scmp.eq.s32.totalorder %s17, 1
      %p161 = scmp.ne.s32.totalorder %s156, %s158
      %p162 = scmp.eq.s32.totalorder %s17, 0
      %p163 = por %p161, %p162
      %p164 = scmp.ne.s32.totalorder %s156, %s158
      %p165 = scmp.eq.s32.totalorder %s22, 1
      %p166 = por %p164, %p165
      %p167 = scmp.ne.s32.totalorder %s158, %s159
      %p168 = scmp.eq.s32.totalorder %s22, 0
      %p169 = por %p167, %p168
      %p170 = scmp.ne.s32.totalorder %s158, %s159
      %p171 = scmp.eq.s32.totalorder %s23, 1
      %p172 = por %p170, %p171
      %p174 = scmp.ne.s32.totalorder %s159, %s173
      %p175 = scmp.eq.s32.totalorder %s23, 0
      %p176 = por %p174, %p175
      %s177 = ssub.s32 %s17, %s24
      %p178 = scmp.eq.s32.totalorder %s177, 0
      %s180 = sadd.s32 %s179, 1
      %s181 = scalar_select %p178, %s179, %s180
      %p184 = pneg %p178
      %p185 = scmp.eq.s32.totalorder %s17, 1
      %p186 = por %p184, %p185
      %p187 = scmp.ne.s32.totalorder %s179, %s182
      %p188 = scmp.eq.s32.totalorder %s17, 0
      %p189 = por %p187, %p188
      %p190 = scmp.ne.s32.totalorder %s179, %s182
      %p191 = scmp.eq.s32.totalorder %s22, 1
      %p192 = por %p190, %p191
      %p193 = scmp.ne.s32.totalorder %s182, %s183
      %p194 = scmp.eq.s32.totalorder %s22, 0
      %p195 = por %p193, %p194
      %p196 = scmp.ne.s32.totalorder %s182, %s183
      %p197 = scmp.eq.s32.totalorder %s23, 1
      %p198 = por %p196, %p197
      %p200 = scmp.ne.s32.totalorder %s183, %s199
      %p201 = scmp.eq.s32.totalorder %s23, 0
      %p202 = por %p200, %p201
      %p203 = scmp.le.s32.totalorder 1, %s17
      %p204 = scmp.lt.s32.totalorder %s17, 3
      %p205 = pnand %p203, %p204
      %p206 = pneg %p205
      // Predicated region
      $region9: #{tpu_custom_call.1} parent=5 // pred_check
        _
      $region10: #{tpu_custom_call.1} parent=5 // pred_check_branch
        %208 = sbr.rel (%p205) target = $region12
      $region11: #{tpu_custom_call.1} parent=5 // pred_region
        %s209 = ssub.s32 %s17, 1
        // Predicated region
        $region13: #{tpu_custom_call.1} parent=11 // pred_check
          %p210 = pneg %p64
        $region14: #{tpu_custom_call.1} parent=11 // pred_check_branch
          %212 = sbr.rel (%p210) target = $region16
        $region15: #{tpu_custom_call.1} parent=11 // pred_region
          _
        $region16: #{tpu_custom_call.1} parent=11 // pred_fallthru
          _
        // Predicated region
        $region17: #{tpu_custom_call.1} parent=11 // pred_check
          %p213 = pneg %p85
        $region18: #{tpu_custom_call.1} parent=11 // pred_check_branch
          %215 = sbr.rel (%p213) target = $region20
        $region19: #{tpu_custom_call.1} parent=11 // pred_region
          _
        $region20: #{tpu_custom_call.1} parent=11 // pred_fallthru
          _
        // Predicated region
        $region21: #{tpu_custom_call.1} parent=11 // pred_check
          %p216 = pneg %p106
        $region22: #{tpu_custom_call.1} parent=11 // pred_check_branch
          %218 = sbr.rel (%p216) target = $region24
        $region23: #{tpu_custom_call.1} parent=11 // pred_region
          %s220 = ssub.s32 4096, 4096
          %221 = vsyncadd [#allocation3], %s220
          %s222 = sshll.u32 [#allocation2], 4
          %s223 = int_to_ptr.vmem [resolvable:$true] %s222
          %228 = dma.hbm_to_vmem [thread:$0]  %s3, 4096, %s223, [#allocation3], 128, 128, 8
        $region24: #{tpu_custom_call.1} parent=11 // pred_fallthru
          _
        // Predicated region
        $region25: #{tpu_custom_call.1} parent=11 // pred_check
          %p229 = pneg %p127
        $region26: #{tpu_custom_call.1} parent=11 // pred_check_branch
          %231 = sbr.rel (%p229) target = $region28
        $region27: #{tpu_custom_call.1} parent=11 // pred_region
          _
        $region28: #{tpu_custom_call.1} parent=11 // pred_fallthru
          _
        // Predicated region
        $region29: #{tpu_custom_call.1} parent=11 // pred_check
          %p232 = pneg %p148
        $region30: #{tpu_custom_call.1} parent=11 // pred_check_branch
          %234 = sbr.rel (%p232) target = $region32
        $region31: #{tpu_custom_call.1} parent=11 // pred_region
          _
        $region32: #{tpu_custom_call.1} parent=11 // pred_fallthru
          _
        // Predicated region
        $region33: #{tpu_custom_call.1} parent=11 // pred_check
          %p235 = pneg %p169
        $region34: #{tpu_custom_call.1} parent=11 // pred_check_branch
          %237 = sbr.rel (%p235) target = $region36
        $region35: #{tpu_custom_call.1} parent=11 // pred_region
          _
        $region36: #{tpu_custom_call.1} parent=11 // pred_fallthru
          _
      $region12: #{tpu_custom_call.1} parent=5 // pred_fallthru
        _
      %p238 = scmp.lt.s32.totalorder %s17, 2
      // Predicated region
      $region37: #{tpu_custom_call.1} parent=5 // pred_check
        %p239 = pneg %p238
      $region38: #{tpu_custom_call.1} parent=5 // pred_check_branch
        %241 = sbr.rel (%p239) target = $region40
      $region39: #{tpu_custom_call.1} parent=5 // pred_region
        // Predicated region
        $region41: #{tpu_custom_call.1} parent=39 // pred_check
          %p242 = pneg %p37
        $region42: #{tpu_custom_call.1} parent=39 // pred_check_branch
          %244 = sbr.rel (%p242) target = $region44
        $region43: #{tpu_custom_call.1} parent=39 // pred_region
          %p245 = scmp.lt.s32.totalorder %s17, 1
          %s246 = scalar_select %p245, %s17, 1
          %s247 = smul.addr %s246, 8
          %s248 = scalar_lea.vmem %s0, %s247
        $region44: #{tpu_custom_call.1} parent=39 // pred_fallthru
          _
      $region40: #{tpu_custom_call.1} parent=5 // pred_fallthru
        _
      %p249 = scmp.le.s32.totalorder 1, %s17
      %p250 = scmp.lt.s32.totalorder %s17, 3
      %p251 = pnand %p249, %p250
      %p252 = pneg %p251
      // Predicated region
      $region45: #{tpu_custom_call.1} parent=5 // pred_check
        _
      $region46: #{tpu_custom_call.1} parent=5 // pred_check_branch
        %254 = sbr.rel (%p251) target = $region48
      $region47: #{tpu_custom_call.1} parent=5 // pred_region
        %s255 = ssub.s32 %s17, 1
        // Predicated region
        $region49: #{tpu_custom_call.1} parent=47 // pred_check
          %p256 = pneg %p106
        $region50: #{tpu_custom_call.1} parent=47 // pred_check_branch
          %258 = sbr.rel (%p256) target = $region52
        $region51: #{tpu_custom_call.1} parent=47 // pred_region
          %259 = dma.done [#allocation3], 4096
        $region52: #{tpu_custom_call.1} parent=47 // pred_fallthru
          _
        %p260 = scmp.lt.s32.totalorder %s22, 1
        %s261 = scalar_select %p260, %s22, 1
        %s262 = smul.addr %s261, 8
        %s263 = scalar_lea.vmem %s0, %s262
        %p264 = pneg %p43
        %p265 = pneg %p40
        %p266 = pneg %p64
        %p267 = pneg %p61
        %p268 = pneg %p85
        %p269 = pneg %p82
        %p270 = pneg %p106
        %p271 = pneg %p103
        %p272 = pneg %p127
        %p273 = pneg %p124
        %p274 = pneg %p148
        %p275 = pneg %p145
        %p276 = pneg %p169
        %p277 = pneg %p166
        %p278 = pneg %p195
        %p279 = pneg %p192
        %s280 = sand.u32 %s182, 1
        %s281 = scalar_lea.sflag [#allocation4], %s280
        %s282 = sand.u32 %s182, 1
        %s283 = smul.addr %s282, 8
        %s284 = scalar_lea.vmem [#allocation5], %s283
        %p285 = scmp.lt.s32.totalorder %s22, 1
        %s286 = scalar_select %p285, %s22, 1
        %s287 = smul.addr %s286, 8
        %s288 = scalar_lea.vmem %s0, %s287
        %v290 = vld [vmem:[%s288] sm:$0xff]
        %v291 = vpack.c.bf16 %v290, %v290
        %v292 = vld [vmem:[%s1] sm:$0xff]
        %v293 = vld [vmem:[%s1 + $0x8] sm:$0xff]
        %v294 = vld [vmem:[%s2] sm:$0x3]
        %v296 = vlaneseq
        %v297 = vshrl.u32 %v296, 7
        %v298 = vsub.s32 0, %v297
        %v299 = vrot.slane %v294, %v298
        %v300 = vlaneseq
        %v301 = vshrl.u32 %v300, 7
        %v302 = vsub.s32 1, %v301
        %v303 = vrot.slane %v294, %v302
        %v308 = vunpack.c.l.b16 %v292
        %v309 = vunpack.c.h.b16 %v292
        %v310 = vunpack.c.l.b16 %v293
        %v311 = vunpack.c.h.b16 %v293
        %v312 = vpack.c.b16 %v310, %v308
        %v313 = vpack.c.b16 %v311, %v309
        %vm316 = vcmask 130048
        %v318 = vsel %vm316, %v291, 0
        %320 = vmatprep.subr.bf16.mxu0 %v313
        %321 = vmatpush1.bf16.msra.mxu0 %v312
        %322 = vmatprep.subr.bf16.mxu0 0
        %323 = vmatpush1.bf16.msra.mxu0 0
        %324 = vmatprep.subr.bf16.mxu0 0
        %325 = vmatpush1.bf16.msra.mxu0 0
        %326 = vmatprep.subr.bf16.mxu0 0
        %327 = vmatpush1.bf16.msra.mxu0 0
        %328 = vmatprep.subr.bf16.mxu0 0
        %329 = vmatpush1.bf16.msra.mxu0 0
        %330 = vmatprep.subr.bf16.mxu0 0
        %331 = vmatpush1.bf16.msra.mxu0 0
        %332 = vmatprep.subr.bf16.mxu0 0
        %333 = vmatpush1.bf16.msra.mxu0 0
        %334 = vmatprep.subr.bf16.mxu0 0
        %335 = vmatpush1.bf16.msra.mxu0 0
        %336 = vmatprep.subr.bf16.mxu0 0
        %337 = vmatpush1.bf16.msra.mxu0 0
        %338 = vmatprep.subr.bf16.mxu0 0
        %339 = vmatpush1.bf16.msra.mxu0 0
        %340 = vmatprep.subr.bf16.mxu0 0
        %341 = vmatpush1.bf16.msra.mxu0 0
        %342 = vmatprep.subr.bf16.mxu0 0
        %343 = vmatpush1.bf16.msra.mxu0 0
        %344 = vmatprep.subr.bf16.mxu0 0
        %345 = vmatpush1.bf16.msra.mxu0 0
        %346 = vmatprep.subr.bf16.mxu0 0
        %347 = vmatpush1.bf16.msra.mxu0 0
        %348 = vmatprep.subr.bf16.mxu0 0
        %349 = vmatpush1.bf16.msra.mxu0 0
        %350 = vmatprep.subr.bf16.mxu0 0
        %351 = vmatpush1.bf16.msra.mxu0 0
        %352 = vmatprep.mubr.bf16.mxu0 0
        %353 = vmatmul.mubr.bf16.gmra.mrb[0].mxu0 %v318
        %v354 = vpop.f32.mrb[0].mxu0
        %v355 = vadd.f32 %v299, %v354
        %v356 = vpop.f32.mrb[0].mxu0
        %v357 = vadd.f32 %v303, %v356
        %v358 = vpop.f32.mrb[0].mxu0
        %v359 = vpop.f32.mrb[0].mxu0
        %360 = vdwg.mxu0
        %v361 = vtanh.pop %v355
        %v362 = vtanh.pop %v357
        %v363 = vpack.c.bf16 %v361, %v361
        %v364 = vpack.c.bf16 %v362, %v362
        %v365 = vld [vmem:[#allocation2] sm:$0xff]
        %v366 = vld [vmem:[#allocation2 + $0x8] sm:$0xff]
        %v367 = vld [vmem:[#allocation2 + $0x10] sm:$0xff]
        %v368 = vld [vmem:[#allocation2 + $0x18] sm:$0xff]
        %v369 = vld [vmem:[#allocation2 + $0x20] sm:$0xff]
        %v370 = vld [vmem:[#allocation2 + $0x28] sm:$0xff]
        %v371 = vld [vmem:[#allocation2 + $0x30] sm:$0xff]
        %v372 = vld [vmem:[#allocation2 + $0x38] sm:$0xff]
        %v373 = vld [vmem:[#allocation2 + $0x40] sm:$0xff]
        %v374 = vld [vmem:[#allocation2 + $0x48] sm:$0xff]
        %v375 = vld [vmem:[#allocation2 + $0x50] sm:$0xff]
        %v376 = vld [vmem:[#allocation2 + $0x58] sm:$0xff]
        %v377 = vld [vmem:[#allocation2 + $0x60] sm:$0xff]
        %v378 = vld [vmem:[#allocation2 + $0x68] sm:$0xff]
        %v379 = vld [vmem:[#allocation2 + $0x70] sm:$0xff]
        %v380 = vld [vmem:[#allocation2 + $0x78] sm:$0xff]
        %v381 = vld [vmem:[#allocation2 + $0x80] sm:$0xff]
        %v382 = vld [vmem:[#allocation2 + $0x88] sm:$0xff]
        %v383 = vld [vmem:[#allocation2 + $0x90] sm:$0xff]
        %v384 = vld [vmem:[#allocation2 + $0x98] sm:$0xff]
        %v385 = vld [vmem:[#allocation2 + $0xa0] sm:$0xff]
        %v386 = vld [vmem:[#allocation2 + $0xa8] sm:$0xff]
        %v387 = vld [vmem:[#allocation2 + $0xb0] sm:$0xff]
        %v388 = vld [vmem:[#allocation2 + $0xb8] sm:$0xff]
        %v389 = vld [vmem:[#allocation2 + $0xc0] sm:$0xff]
        %v390 = vld [vmem:[#allocation2 + $0xc8] sm:$0xff]
        %v391 = vld [vmem:[#allocation2 + $0xd0] sm:$0xff]
        %v392 = vld [vmem:[#allocation2 + $0xd8] sm:$0xff]
        %v393 = vld [vmem:[#allocation2 + $0xe0] sm:$0xff]
        %v394 = vld [vmem:[#allocation2 + $0xe8] sm:$0xff]
        %v395 = vld [vmem:[#allocation2 + $0xf0] sm:$0xff]
        %v396 = vld [vmem:[#allocation2 + $0xf8] sm:$0xff]
        %v397 = vld [vmem:[%s4] sm:$0x3]
        %v399 = vlaneseq
        %v400 = vshrl.u32 %v399, 7
        %v401 = vsub.s32 0, %v400
        %v402 = vrot.slane %v397, %v401
        %v403 = vlaneseq
        %v404 = vshrl.u32 %v403, 7
        %v405 = vsub.s32 1, %v404
        %v406 = vrot.slane %v397, %v405
        %v441 = vunpack.c.l.b16 %v365
        %v442 = vunpack.c.h.b16 %v365
        %v443 = vunpack.c.l.b16 %v366
        %v444 = vunpack.c.h.b16 %v366
        %v445 = vunpack.c.l.b16 %v367
        %v446 = vunpack.c.h.b16 %v367
        %v447 = vunpack.c.l.b16 %v368
        %v448 = vunpack.c.h.b16 %v368
        %v449 = vunpack.c.l.b16 %v369
        %v450 = vunpack.c.h.b16 %v369
        %v451 = vunpack.c.l.b16 %v370
        %v452 = vunpack.c.h.b16 %v370
        %v453 = vunpack.c.l.b16 %v371
        %v454 = vunpack.c.h.b16 %v371
        %v455 = vunpack.c.l.b16 %v372
        %v456 = vunpack.c.h.b16 %v372
        %v457 = vunpack.c.l.b16 %v373
        %v458 = vunpack.c.h.b16 %v373
        %v459 = vunpack.c.l.b16 %v374
        %v460 = vunpack.c.h.b16 %v374
        %v461 = vunpack.c.l.b16 %v375
        %v462 = vunpack.c.h.b16 %v375
        %v463 = vunpack.c.l.b16 %v376
        %v464 = vunpack.c.h.b16 %v376
        %v465 = vunpack.c.l.b16 %v377
        %v466 = vunpack.c.h.b16 %v377
        %v467 = vunpack.c.l.b16 %v378
        %v468 = vunpack.c.h.b16 %v378
        %v469 = vunpack.c.l.b16 %v379
        %v470 = vunpack.c.h.b16 %v379
        %v471 = vunpack.c.l.b16 %v380
        %v472 = vunpack.c.h.b16 %v380
        %v473 = vunpack.c.l.b16 %v381
        %v474 = vunpack.c.h.b16 %v381
        %v475 = vunpack.c.l.b16 %v382
        %v476 = vunpack.c.h.b16 %v382
        %v477 = vunpack.c.l.b16 %v383
        %v478 = vunpack.c.h.b16 %v383
        %v479 = vunpack.c.l.b16 %v384
        %v480 = vunpack.c.h.b16 %v384
        %v481 = vunpack.c.l.b16 %v385
        %v482 = vunpack.c.h.b16 %v385
        %v483 = vunpack.c.l.b16 %v386
        %v484 = vunpack.c.h.b16 %v386
        %v485 = vunpack.c.l.b16 %v387
        %v486 = vunpack.c.h.b16 %v387
        %v487 = vunpack.c.l.b16 %v388
        %v488 = vunpack.c.h.b16 %v388
        %v489 = vunpack.c.l.b16 %v389
        %v490 = vunpack.c.h.b16 %v389
        %v491 = vunpack.c.l.b16 %v390
        %v492 = vunpack.c.h.b16 %v390
        %v493 = vunpack.c.l.b16 %v391
        %v494 = vunpack.c.h.b16 %v391
        %v495 = vunpack.c.l.b16 %v392
        %v496 = vunpack.c.h.b16 %v392
        %v497 = vunpack.c.l.b16 %v393
        %v498 = vunpack.c.h.b16 %v393
        %v499 = vunpack.c.l.b16 %v394
        %v500 = vunpack.c.h.b16 %v394
        %v501 = vunpack.c.l.b16 %v395
        %v502 = vunpack.c.h.b16 %v395
        %v503 = vunpack.c.l.b16 %v396
        %v504 = vunpack.c.h.b16 %v396
        %v505 = vpack.c.b16 %v443, %v441
        %v506 = vpack.c.b16 %v444, %v442
        %v507 = vpack.c.b16 %v447, %v445
        %v508 = vpack.c.b16 %v448, %v446
        %v509 = vpack.c.b16 %v451, %v449
        %v510 = vpack.c.b16 %v452, %v450
        %v511 = vpack.c.b16 %v455, %v453
        %v512 = vpack.c.b16 %v456, %v454
        %v513 = vpack.c.b16 %v459, %v457
        %v514 = vpack.c.b16 %v460, %v458
        %v515 = vpack.c.b16 %v463, %v461
        %v516 = vpack.c.b16 %v464, %v462
        %v517 = vpack.c.b16 %v467, %v465
        %v518 = vpack.c.b16 %v468, %v466
        %v519 = vpack.c.b16 %v471, %v469
        %v520 = vpack.c.b16 %v472, %v470
        %v521 = vpack.c.b16 %v475, %v473
        %v522 = vpack.c.b16 %v476, %v474
        %v523 = vpack.c.b16 %v479, %v477
        %v524 = vpack.c.b16 %v480, %v478
        %v525 = vpack.c.b16 %v483, %v481
        %v526 = vpack.c.b16 %v484, %v482
        %v527 = vpack.c.b16 %v487, %v485
        %v528 = vpack.c.b16 %v488, %v486
        %v529 = vpack.c.b16 %v491, %v489
        %v530 = vpack.c.b16 %v492, %v490
        %v531 = vpack.c.b16 %v495, %v493
        %v532 = vpack.c.b16 %v496, %v494
        %v533 = vpack.c.b16 %v499, %v497
        %v534 = vpack.c.b16 %v500, %v498
        %v535 = vpack.c.b16 %v503, %v501
        %v536 = vpack.c.b16 %v504, %v502
        %569 = vmatprep.subr.bf16.mxu0 %v506
        %570 = vmatpush1.bf16.msra.mxu0 %v505
        %571 = vmatprep.subr.bf16.mxu0 %v508
        %572 = vmatpush1.bf16.msra.mxu0 %v507
        %573 = vmatprep.subr.bf16.mxu0 %v510
        %574 = vmatpush1.bf16.msra.mxu0 %v509
        %575 = vmatprep.subr.bf16.mxu0 %v512
        %576 = vmatpush1.bf16.msra.mxu0 %v511
        %577 = vmatprep.subr.bf16.mxu0 %v514
        %578 = vmatpush1.bf16.msra.mxu0 %v513
        %579 = vmatprep.subr.bf16.mxu0 %v516
        %580 = vmatpush1.bf16.msra.mxu0 %v515
        %581 = vmatprep.subr.bf16.mxu0 %v518
        %582 = vmatpush1.bf16.msra.mxu0 %v517
        %583 = vmatprep.subr.bf16.mxu0 %v520
        %584 = vmatpush1.bf16.msra.mxu0 %v519
        %585 = vmatprep.subr.bf16.mxu0 %v522
        %586 = vmatpush1.bf16.msra.mxu0 %v521
        %587 = vmatprep.subr.bf16.mxu0 %v524
        %588 = vmatpush1.bf16.msra.mxu0 %v523
        %589 = vmatprep.subr.bf16.mxu0 %v526
        %590 = vmatpush1.bf16.msra.mxu0 %v525
        %591 = vmatprep.subr.bf16.mxu0 %v528
        %592 = vmatpush1.bf16.msra.mxu0 %v527
        %593 = vmatprep.subr.bf16.mxu0 %v530
        %594 = vmatpush1.bf16.msra.mxu0 %v529
        %595 = vmatprep.subr.bf16.mxu0 %v532
        %596 = vmatpush1.bf16.msra.mxu0 %v531
        %597 = vmatprep.subr.bf16.mxu0 %v534
        %598 = vmatpush1.bf16.msra.mxu0 %v533
        %599 = vmatprep.subr.bf16.mxu0 %v536
        %600 = vmatpush1.bf16.msra.mxu0 %v535
        %601 = vmatprep.mubr.bf16.mxu0 %v364
        %602 = vmatmul.mubr.bf16.gmra.mrb[0].mxu0 %v363
        %v603 = vpop.f32.mrb[0].mxu0
        %v604 = vadd.f32 %v402, %v603
        %v605 = vpop.f32.mrb[0].mxu0
        %v606 = vadd.f32 %v406, %v605
        %v607 = vpop.f32.mrb[0].mxu0
        %v608 = vpop.f32.mrb[0].mxu0
        %609 = vdwg.mxu0
        %v610 = vtanh.pop %v604
        %v611 = vtanh.pop %v606
        %v612 = vpack.c.bf16 %v610, %v610
        %v613 = vpack.c.bf16 %v611, %v611
        %v614 = vld [vmem:[%s5] sm:$0xf]
        %v615 = vld [vmem:[%s5 + $0x4] sm:$0xf]
        %v616 = vld [vmem:[%s5 + $0x8] sm:$0xf]
        %v617 = vld [vmem:[%s5 + $0xc] sm:$0xf]
        %v618 = vld [vmem:[%s5 + $0x10] sm:$0xf]
        %v619 = vld [vmem:[%s5 + $0x14] sm:$0xf]
        %v620 = vld [vmem:[%s5 + $0x18] sm:$0xf]
        %v621 = vld [vmem:[%s5 + $0x1c] sm:$0xf]
        %v622 = vld [vmem:[%s5 + $0x20] sm:$0xf]
        %v623 = vld [vmem:[%s5 + $0x24] sm:$0xf]
        %v624 = vld [vmem:[%s5 + $0x28] sm:$0xf]
        %v625 = vld [vmem:[%s5 + $0x2c] sm:$0xf]
        %v626 = vld [vmem:[%s5 + $0x30] sm:$0xf]
        %v627 = vld [vmem:[%s5 + $0x34] sm:$0xf]
        %v628 = vld [vmem:[%s5 + $0x38] sm:$0xf]
        %v629 = vld [vmem:[%s5 + $0x3c] sm:$0xf]
        %v630 = vld [vmem:[%s5 + $0x40] sm:$0xf]
        %v631 = vld [vmem:[%s5 + $0x44] sm:$0xf]
        %v632 = vld [vmem:[%s5 + $0x48] sm:$0xf]
        %v633 = vld [vmem:[%s5 + $0x4c] sm:$0xf]
        %v634 = vld [vmem:[%s5 + $0x50] sm:$0xf]
        %v635 = vld [vmem:[%s5 + $0x54] sm:$0xf]
        %v636 = vld [vmem:[%s5 + $0x58] sm:$0xf]
        %v637 = vld [vmem:[%s5 + $0x5c] sm:$0xf]
        %v638 = vld [vmem:[%s5 + $0x60] sm:$0xf]
        %v639 = vld [vmem:[%s5 + $0x64] sm:$0xf]
        %v640 = vld [vmem:[%s5 + $0x68] sm:$0xf]
        %v641 = vld [vmem:[%s5 + $0x6c] sm:$0xf]
        %v642 = vld [vmem:[%s5 + $0x70] sm:$0xf]
        %v643 = vld [vmem:[%s5 + $0x74] sm:$0xf]
        %v644 = vld [vmem:[%s5 + $0x78] sm:$0xf]
        %v645 = vld [vmem:[%s5 + $0x7c] sm:$0xf]
        %v646 = vld [vmem:[%s6] sm:$0x1]
        %v648 = vlaneseq
        %v649 = vshrl.u32 %v648, 7
        %v650 = vsub.s32 0, %v649
        %v651 = vrot.slane %v646, %v650
        %v685 = vunpack.c.l.b16 %v614
        %v686 = vunpack.c.l.b16 %v615
        %v687 = vunpack.c.l.b16 %v616
        %v688 = vunpack.c.l.b16 %v617
        %v689 = vunpack.c.l.b16 %v618
        %v690 = vunpack.c.l.b16 %v619
        %v691 = vunpack.c.l.b16 %v620
        %v692 = vunpack.c.l.b16 %v621
        %v693 = vunpack.c.l.b16 %v622
        %v694 = vunpack.c.l.b16 %v623
        %v695 = vunpack.c.l.b16 %v624
        %v696 = vunpack.c.l.b16 %v625
        %v697 = vunpack.c.l.b16 %v626
        %v698 = vunpack.c.l.b16 %v627
        %v699 = vunpack.c.l.b16 %v628
        %v700 = vunpack.c.l.b16 %v629
        %v701 = vunpack.c.l.b16 %v630
        %v702 = vunpack.c.l.b16 %v631
        %v703 = vunpack.c.l.b16 %v632
        %v704 = vunpack.c.l.b16 %v633
        %v705 = vunpack.c.l.b16 %v634
        %v706 = vunpack.c.l.b16 %v635
        %v707 = vunpack.c.l.b16 %v636
        %v708 = vunpack.c.l.b16 %v637
        %v709 = vunpack.c.l.b16 %v638
        %v710 = vunpack.c.l.b16 %v639
        %v711 = vunpack.c.l.b16 %v640
        %v712 = vunpack.c.l.b16 %v641
        %v713 = vunpack.c.l.b16 %v642
        %v714 = vunpack.c.l.b16 %v643
        %v715 = vunpack.c.l.b16 %v644
        %v716 = vunpack.c.l.b16 %v645
        %v717 = vpack.c.b16 %v686, %v685
        %v718 = vpack.c.b16 %v688, %v687
        %v719 = vpack.c.b16 %v690, %v689
        %v720 = vpack.c.b16 %v692, %v691
        %v721 = vpack.c.b16 %v694, %v693
        %v722 = vpack.c.b16 %v696, %v695
        %v723 = vpack.c.b16 %v698, %v697
        %v724 = vpack.c.b16 %v700, %v699
        %v725 = vpack.c.b16 %v702, %v701
        %v726 = vpack.c.b16 %v704, %v703
        %v727 = vpack.c.b16 %v706, %v705
        %v728 = vpack.c.b16 %v708, %v707
        %v729 = vpack.c.b16 %v710, %v709
        %v730 = vpack.c.b16 %v712, %v711
        %v731 = vpack.c.b16 %v714, %v713
        %v732 = vpack.c.b16 %v716, %v715
        %749 = vmatprep.subr.bf16.mxu0 0
        %750 = vmatpush1.bf16.msra.mxu0 %v717
        %751 = vmatprep.subr.bf16.mxu0 0
        %752 = vmatpush1.bf16.msra.mxu0 %v718
        %753 = vmatprep.subr.bf16.mxu0 0
        %754 = vmatpush1.bf16.msra.mxu0 %v719
        %755 = vmatprep.subr.bf16.mxu0 0
        %756 = vmatpush1.bf16.msra.mxu0 %v720
        %757 = vmatprep.subr.bf16.mxu0 0
        %758 = vmatpush1.bf16.msra.mxu0 %v721
        %759 = vmatprep.subr.bf16.mxu0 0
        %760 = vmatpush1.bf16.msra.mxu0 %v722
        %761 = vmatprep.subr.bf16.mxu0 0
        %762 = vmatpush1.bf16.msra.mxu0 %v723
        %763 = vmatprep.subr.bf16.mxu0 0
        %764 = vmatpush1.bf16.msra.mxu0 %v724
        %765 = vmatprep.subr.bf16.mxu0 0
        %766 = vmatpush1.bf16.msra.mxu0 %v725
        %767 = vmatprep.subr.bf16.mxu0 0
        %768 = vmatpush1.bf16.msra.mxu0 %v726
        %769 = vmatprep.subr.bf16.mxu0 0
        %770 = vmatpush1.bf16.msra.mxu0 %v727
        %771 = vmatprep.subr.bf16.mxu0 0
        %772 = vmatpush1.bf16.msra.mxu0 %v728
        %773 = vmatprep.subr.bf16.mxu0 0
        %774 = vmatpush1.bf16.msra.mxu0 %v729
        %775 = vmatprep.subr.bf16.mxu0 0
        %776 = vmatpush1.bf16.msra.mxu0 %v730
        %777 = vmatprep.subr.bf16.mxu0 0
        %778 = vmatpush1.bf16.msra.mxu0 %v731
        %779 = vmatprep.subr.bf16.mxu0 0
        %780 = vmatpush1.bf16.msra.mxu0 %v732
        %781 = vmatprep.mubr.bf16.mxu0 %v613
        %782 = vmatmul.mubr.bf16.gmra.mrb[0].mxu0 %v612
        %v783 = vpop.f32.mrb[0].mxu0
        %v784 = vadd.f32 %v651, %v783
        %v785 = vpop.f32.mrb[0].mxu0
        %v786 = vpop.f32.mrb[0].mxu0
        %v787 = vpop.f32.mrb[0].mxu0
        %788 = vdwg.mxu0
        %v789 = vxor.u32 %v784, 2147483648
        %v790 = vmul.f32 %v789, 1.442695
        %v791 = vpow.pop %v790
        %v792 = vadd.f32 %v791, 1.0
        %v793 = vrcp.pop %v792
        %v794 = vmul.f32 1.0, %v793
        %795 = vst.msk [vmem:[%s284] sm:$0xff] %vm316, %v794
        %s796 = sand.u32 %s182, 1
        %s797 = scalar_lea.sflag [#allocation4], %s796
        %s798 = sand.u32 %s182, 1
        %s799 = smul.addr %s798, 8
        %s800 = scalar_lea.vmem [#allocation5], %s799
        // Predicated region
        $region53: #{tpu_custom_call.1} parent=47 // pred_check
          %p801 = pneg %p192
        $region54: #{tpu_custom_call.1} parent=47 // pred_check_branch
          %803 = sbr.rel (%p801) target = $region56
        $region55: #{tpu_custom_call.1} parent=47 // pred_region
          %s805 = ssub.s32 128, 128
          %806 = vsyncadd %s797, %s805
          %s807 = smul.addr %s22, 128
          %s808 = scalar_lea.hbm %s7, %s807
          %s810 = sshll.u32 %s800, 4
          %s811 = int_to_ptr.vmem [resolvable:$true] %s810
          %813 = dma.vmem_to_hbm [thread:$0]  %s811, 128, %s808, %s797
        $region56: #{tpu_custom_call.1} parent=47 // pred_fallthru
          _
      $region48: #{tpu_custom_call.1} parent=5 // pred_fallthru
        _
      %p814 = scmp.le.s32.totalorder 2, %s17
      // Predicated region
      $region57: #{tpu_custom_call.1} parent=5 // pred_check
        %p815 = pneg %p814
      $region58: #{tpu_custom_call.1} parent=5 // pred_check_branch
        %817 = sbr.rel (%p815) target = $region60
      $region59: #{tpu_custom_call.1} parent=5 // pred_region
        %s818 = ssub.s32 %s17, 2
        // Predicated region
        $region61: #{tpu_custom_call.1} parent=59 // pred_check
          %p819 = pneg %p198
        $region62: #{tpu_custom_call.1} parent=59 // pred_check_branch
          %821 = sbr.rel (%p819) target = $region64
        $region63: #{tpu_custom_call.1} parent=59 // pred_region
          %s822 = sand.u32 %s183, 1
          %s823 = scalar_lea.sflag [#allocation4], %s822
          %s824 = sand.u32 %s183, 1
          %s825 = smul.addr %s824, 8
          %s826 = scalar_lea.vmem [#allocation5], %s825
          %827 = dma.done %s823, 128
        $region64: #{tpu_custom_call.1} parent=59 // pred_fallthru
          _
      $region60: #{tpu_custom_call.1} parent=5 // pred_fallthru
        _
    $region6: #{tpu_custom_call.1} parent=1 // loop_footer
      %s21 = sadd.s32 1, %s17
    $region7: #{tpu_custom_call.1} parent=1 // loop_footer_branch
      %16 = sbr.rel target = $region3
    $region8: #{tpu_custom_call.1} parent=1 // loop_exit
      _
    %828 = vsyncpa [#allocation3], 1
    %s829 = scalar_lea.sflag [#allocation3], 1
    %830 = vsyncpa %s829, 1
    %831 = vsyncpa [#allocation4], 1
    %s832 = scalar_lea.sflag [#allocation4], 1
    %833 = vsyncpa %s832, 1

</llo_original>
